<compile_context>
chip_gen: v7x
topology: tpu7x:2x2x1
jax: 0.10.0
libtpu: 0.0.40
codegen_flags: <defaults>
</compile_context>

<pallas_src>
import jax
import jax.numpy as jnp
from jax.experimental import pallas as pl
from jax.experimental.pallas import tpu as pltpu


def _make_sublayer_kernel(eps: float, features: int):
    inv_n = 1.0 / features
    # ddof=1 (torch.std default). Guard H==1 to avoid divide-by-zero at trace time.
    ddof_scale = features / max(features - 1, 1)

    def kernel(x_ref, a_ref, b_ref, o_ref):
        # Upcast at the VMEM boundary only; HBM traffic stays in the caller dtype
        # (bf16 inputs are accepted and halve the bytes moved).
        x = x_ref[...].astype(jnp.float32)                     # (tm, H)
        a = a_ref[...].astype(jnp.float32)                     # (1, H)
        b = b_ref[...].astype(jnp.float32)                     # (1, H)

        # Fused single-pass reduction: sum and sum-of-squares in one sweep.
        s1 = jnp.sum(x, axis=-1, keepdims=True)                # (tm, 1)
        s2 = jnp.sum(x * x, axis=-1, keepdims=True)            # (tm, 1)
        mean = s1 * inv_n
        var_b = jnp.maximum(s2 * inv_n - mean * mean, 0.0)     # biased var, clamp fp noise
        std = jnp.sqrt(var_b * ddof_scale)                     # unbiased std (torch.std)

        # Reciprocal on the (tm, 1) column instead of a full (tm, H) divide.
        # approx=True would ride the EUP for free but is too coarse for the
        # f32 atol=1e-5 self-check below; enable it when emitting bf16.
        inv = pl.reciprocal(std + eps, approx=False)           # (tm, 1)

        scale = a * inv                                        # (tm, H)
        o_ref[...] = (x + (x - mean) * scale + b).astype(o_ref.dtype)

    return kernel


def _choose_row_tile(rows: int, hidden: int, dtype_bytes: int) -> int:
    """Pick the row tile: multiple of 8, sized so 2 input + 2 output double
    buffers of (tm, H) stay well under every generation's scoped-VMEM default
    (v5e 16 MiB, v6e 32 MiB, v7x 32 MiB of 64 MiB physical)."""
    budget_bytes = 16 * 1024 * 1024                 # total for the 4 main buffers
    tm = budget_bytes // (4 * hidden * dtype_bytes)
    tm = max(8, min(1024, (tm // 8) * 8))
    rows8 = ((rows + 7) // 8) * 8                   # don't over-pad tiny inputs
    return min(tm, rows8)


def sublayer_connection(x, a_2, b_2, eps=1e-6):
    """x: [B, S, H]. a_2, b_2: [H]. Returns x + LayerNorm(x) (torch semantics)."""
    B, S, H = x.shape
    rows = B * S
    dsize = jnp.dtype(x.dtype).itemsize

    x2d = x.reshape(rows, H)
    a2d = a_2.reshape(1, H)
    b2d = b_2.reshape(1, H)

    tm = _choose_row_tile(rows, H, dsize)
    rows_p = pl.cdiv(rows, tm) * tm
    if rows_p != rows:
        # Pad rows so every grid step is a full tile; padded rows are dropped
        # after the call (zeros are numerically harmless here).
        x2d = jnp.pad(x2d, ((0, rows_p - rows), (0, 0)))

    grid = (rows_p // tm,)

    # Advisory cost hint so XLA schedules neighboring HLO around this
    # memory-bound custom call.
    cost = pl.CostEstimate(
        flops=9 * rows_p * H,
        transcendentals=2 * rows_p,
        bytes_accessed=2 * rows_p * H * dsize + 2 * H * dsize,
    )

    # NOTE: for H < 128 (toy shapes) stores are lane-masked; real hidden sizes
    # (512/1024/4096) are already lane-dense multiples of 128.
    out2d = pl.pallas_call(
        _make_sublayer_kernel(eps, H),
        out_shape=jax.ShapeDtypeStruct((rows_p, H), x.dtype),
        grid_spec=pltpu.PrefetchScalarGridSpec(
            num_scalar_prefetch=0,
            grid=grid,
            in_specs=[
                pl.BlockSpec((tm, H), lambda i: (i, 0)),   # x rows tile
                pl.BlockSpec((1, H), lambda i: (0, 0)),    # a_2 (broadcast)
                pl.BlockSpec((1, H), lambda i: (0, 0)),    # b_2 (broadcast)
            ],
            out_specs=pl.BlockSpec((tm, H), lambda i: (i, 0)),
        ),
        compiler_params=pltpu.CompilerParams(
            dimension_semantics=("parallel",),             # megacore-shard the row axis
            vmem_limit_bytes=32 * 1024 * 1024,             # headroom on all generations
        ),
        cost_estimate=cost,
    )(x2d, a2d, b2d)

    if rows_p != rows:
        out2d = out2d[:rows]
    return out2d.reshape(B, S, H)


def _reference(x, a_2, b_2, eps=1e-6):
    mean = jnp.mean(x, axis=-1, keepdims=True)
    # unbiased std, matching torch.std default
    var = jnp.sum((x - mean) ** 2, axis=-1, keepdims=True) / (x.shape[-1] - 1)
    std = jnp.sqrt(var)
    return x + (a_2 * (x - mean) / (std + eps) + b_2)


if __name__ == "__main__":
    B, S, H = 2, 8, 32           # batch, seq, hidden(size)
    key = jax.random.PRNGKey(0)
    x = jax.random.normal(key, (B, S, H), dtype=jnp.float32)

    # Deterministic parameter init exactly as in LayerNorm.__init__
    a_2 = jnp.ones((H,), dtype=jnp.float32)
    b_2 = jnp.zeros((H,), dtype=jnp.float32)

    out = sublayer_connection(x, a_2, b_2)
    out = jax.block_until_ready(out)

    ref = _reference(x, a_2, b_2)
    assert out.shape == (B, S, H)
    assert jnp.allclose(out, ref, atol=1e-5, rtol=1e-5), "mismatch vs reference"

    print("KERNEL_OK")
</pallas_src>

<mosaic_0001>
module attributes {stable_mosaic.version = 11 : i64} {
  func.func @kernel(%arg0: i32, %arg1: memref<16x32xf32, #tpu.memory_space<vmem>>, %arg2: memref<1x32xf32, #tpu.memory_space<vmem>>, %arg3: memref<1x32xf32, #tpu.memory_space<vmem>>, %arg4: memref<16x32xf32, #tpu.memory_space<vmem>>) attributes {dimension_semantics = [#tpu.dimension_semantics<parallel>], iteration_bounds = array<i64: 1>, scalar_prefetch = 0 : i64, scratch_operands = 0 : i64, tpu.core_type = #tpu.core_type<tc>, window_params = [{transform_indices = @transform_0, window_bounds = array<i64: 16, 32>}, {pipeline_mode = #tpu.pipeline_mode<synchronous>, transform_indices = @transform_1, window_bounds = array<i64: 1, 32>}, {pipeline_mode = #tpu.pipeline_mode<synchronous>, transform_indices = @transform_2, window_bounds = array<i64: 1, 32>}, {transform_indices = @transform_3, window_bounds = array<i64: 16, 32>}]} {
    %c0 = arith.constant 0 : index
    %c0_0 = arith.constant 0 : index
    %0 = vector.load %arg1[%c0, %c0_0] : memref<16x32xf32, #tpu.memory_space<vmem>>, vector<16x32xf32>
    %c0_1 = arith.constant 0 : index
    %c0_2 = arith.constant 0 : index
    %1 = vector.load %arg2[%c0_1, %c0_2] : memref<1x32xf32, #tpu.memory_space<vmem>>, vector<1x32xf32>
    %c0_3 = arith.constant 0 : index
    %c0_4 = arith.constant 0 : index
    %2 = vector.load %arg3[%c0_3, %c0_4] : memref<1x32xf32, #tpu.memory_space<vmem>>, vector<1x32xf32>
    %cst = arith.constant dense<0.000000e+00> : vector<16xf32>
    %3 = vector.multi_reduction <add>, %0, %cst [1] : vector<16x32xf32> to vector<16xf32>
    %4 = vector.shape_cast %3 : vector<16xf32> to vector<16x1xf32>
    %5 = arith.mulf %0, %0 : vector<16x32xf32>
    %cst_5 = arith.constant dense<0.000000e+00> : vector<16xf32>
    %6 = vector.multi_reduction <add>, %5, %cst_5 [1] : vector<16x32xf32> to vector<16xf32>
    %7 = vector.shape_cast %6 : vector<16xf32> to vector<16x1xf32>
    %cst_6 = arith.constant 3.125000e-02 : f32
    %8 = vector.broadcast %cst_6 : f32 to vector<16x1xf32>
    %9 = arith.mulf %4, %8 : vector<16x1xf32>
    %cst_7 = arith.constant 3.125000e-02 : f32
    %10 = vector.broadcast %cst_7 : f32 to vector<16x1xf32>
    %11 = arith.mulf %7, %10 : vector<16x1xf32>
    %12 = arith.mulf %9, %9 : vector<16x1xf32>
    %13 = arith.subf %11, %12 : vector<16x1xf32>
    %cst_8 = arith.constant 0.000000e+00 : f32
    %14 = vector.broadcast %cst_8 : f32 to vector<16x1xf32>
    %15 = arith.maximumf %13, %14 : vector<16x1xf32>
    %cst_9 = arith.constant 1.03225803 : f32
    %16 = vector.broadcast %cst_9 : f32 to vector<16x1xf32>
    %17 = arith.mulf %15, %16 : vector<16x1xf32>
    %18 = math.sqrt %17 : vector<16x1xf32>
    %cst_10 = arith.constant 9.99999997E-7 : f32
    %19 = vector.broadcast %cst_10 : f32 to vector<16x1xf32>
    %20 = arith.addf %18, %19 : vector<16x1xf32>
    %21 = tpu.reciprocal %20 : vector<16x1xf32> -> vector<16x1xf32>
    %22 = vector.broadcast %1 : vector<1x32xf32> to vector<16x32xf32>
    %23 = vector.broadcast %21 : vector<16x1xf32> to vector<16x32xf32>
    %24 = arith.mulf %22, %23 : vector<16x32xf32>
    %25 = vector.broadcast %9 : vector<16x1xf32> to vector<16x32xf32>
    %26 = arith.subf %0, %25 : vector<16x32xf32>
    %27 = arith.mulf %26, %24 : vector<16x32xf32>
    %28 = arith.addf %0, %27 : vector<16x32xf32>
    %29 = vector.broadcast %2 : vector<1x32xf32> to vector<16x32xf32>
    %30 = arith.addf %28, %29 : vector<16x32xf32>
    %c0_11 = arith.constant 0 : index
    %c0_12 = arith.constant 0 : index
    %31 = vector.load %arg4[%c0_11, %c0_12] : memref<16x32xf32, #tpu.memory_space<vmem>>, vector<16x32xf32>
    tpu.vector_store %arg4[%c0_11, %c0_12], %30 {strides = array<i32>} : memref<16x32xf32, #tpu.memory_space<vmem>>, vector<16x32xf32>,
    return
  }
  func.func @transform_0(%arg0: i32) -> (i32, i32) {
    %c0_i32 = arith.constant 0 : i32
    %c0_i32_0 = arith.constant 0 : i32
    return %arg0, %c0_i32 : i32, i32
  }
  func.func @transform_1(%arg0: i32) -> (i32, i32) {
    %c0_i32 = arith.constant 0 : i32
    %c0_i32_0 = arith.constant 0 : i32
    %c0_i32_1 = arith.constant 0 : i32
    return %c0_i32, %c0_i32_0 : i32, i32
  }
  func.func @transform_2(%arg0: i32) -> (i32, i32) {
    %c0_i32 = arith.constant 0 : i32
    %c0_i32_0 = arith.constant 0 : i32
    %c0_i32_1 = arith.constant 0 : i32
    return %c0_i32, %c0_i32_0 : i32, i32
  }
  func.func @transform_3(%arg0: i32) -> (i32, i32) {
    %c0_i32 = arith.constant 0 : i32
    %c0_i32_0 = arith.constant 0 : i32
    return %arg0, %c0_i32 : i32, i32
  }
}

</mosaic_0001>

<llo_original>
// kernel: tpu_custom_call.1
$region0: #{tpu_custom_call.1}
  #allocation0 [shape = 'u32[]', space=smem, size = 0x4, offset = 0x4, fixed_abs, tag = 'smem constant byte address 0x4 - core index']
  #allocation1 [shape = 'u32[144,128]{1,0:T(1,128)}', space=vmem, size = 0x12000, scoped, tag = 'internal scratch']
  %s0 = inlined_call_operand.hbm [shape: f32[16,32], index: 0, kind: input, shape index: {}]
  %s1 = inlined_call_operand.vmem [shape: f32[1,32], index: 1, kind: input, shape index: {}]
  %s2 = inlined_call_operand.vmem [shape: f32[1,32], index: 2, kind: input, shape index: {}]
  %s3 = inlined_call_operand.hbm [shape: f32[16,32], index: 3, kind: output, shape index: {}]
  %s4 = sld [smem:[#allocation0]]
  $region26: #{tpu_custom_call.1} parent=0
    _
  %s6 = ssub.s32 1, %s4
  %s7 = scalar_select 0, %s6, %s4
  $region1: #{tpu_custom_call.1} parent=0
    #allocation2 [shape = 'u8[8192]{0}', space=vmem, size = 0x2000, scoped, tag = 'input window, operand 0, single buffered']
    #allocation3 [shape = 's32[1]{0}', space=sflag, size = 0x4, scoped, tag = 'scoped memory for tpu_custom_call.1']
    #allocation4 [shape = 's32[1]{0}', space=sflag, size = 0x4, scoped, tag = 'scoped memory for tpu_custom_call.1']
    #allocation5 [shape = 'u8[8192]{0}', space=vmem, size = 0x2000, scoped, tag = 'output window, operand 0, single buffered']
    %8 = vsyncpa [#allocation3], 0
    %9 = vsyncpa [#allocation4], 0
    // Predicated region
    $region2: #{tpu_custom_call.1} parent=1 // pred_check
      _
    $region3: #{tpu_custom_call.1} parent=1 // pred_check_branch
      %11 = sbr.rel (0) target = $region5
    $region4: #{tpu_custom_call.1} parent=1 // pred_region
      %s13 = ssub.s32 256, 256
      %14 = vsyncadd [#allocation3], %s13
      %s15 = sshll.u32 [#allocation2], 4
      %s16 = int_to_ptr.vmem [resolvable:$true] %s15
      %21 = dma.hbm_to_vmem [thread:$0]  %s0, 256, %s16, [#allocation3], 128, 128, 8
    $region5: #{tpu_custom_call.1} parent=1 // pred_fallthru
      _
    // Predicated region
    $region6: #{tpu_custom_call.1} parent=1 // pred_check
      _
    $region7: #{tpu_custom_call.1} parent=1 // pred_check_branch
      %23 = sbr.rel (0) target = $region9
    $region8: #{tpu_custom_call.1} parent=1 // pred_region
      _
    $region9: #{tpu_custom_call.1} parent=1 // pred_fallthru
      _
    // Predicated region
    $region10: #{tpu_custom_call.1} parent=1 // pred_check
      _
    $region11: #{tpu_custom_call.1} parent=1 // pred_check_branch
      %25 = sbr.rel (0) target = $region13
    $region12: #{tpu_custom_call.1} parent=1 // pred_region
      _
    $region13: #{tpu_custom_call.1} parent=1 // pred_fallthru
      _
    // Predicated region
    $region14: #{tpu_custom_call.1} parent=1 // pred_check
      _
    $region15: #{tpu_custom_call.1} parent=1 // pred_check_branch
      %27 = sbr.rel (0) target = $region17
    $region16: #{tpu_custom_call.1} parent=1 // pred_region
      %28 = dma.done [#allocation3], 256
    $region17: #{tpu_custom_call.1} parent=1 // pred_fallthru
      _
    %v29 = vld [vmem:[#allocation2] sm:$0xff]
    %v30 = vld [vmem:[#allocation2 + $0x8] sm:$0xff]
    %v31 = vld [vmem:[%s1] sm:$0x1]
    %v32 = vld [vmem:[%s2] sm:$0x1]
    %vm33 = vcmask 261120
    %v34 = vsel %vm33, %v29, 0.0
    %35 = vadd.xlane.f32.xlu0 %v34
    %v36 = vpop.xlane.xlu0 %35
    %v37 = vsel %vm33, %v30, 0.0
    %38 = vadd.xlane.f32.xlu0 %v37
    %v39 = vpop.xlane.xlu0 %38
    %v40 = vmul.f32 %v29, %v29
    %v41 = vmul.f32 %v30, %v30
    %v42 = vsel %vm33, %v40, 0.0
    %43 = vadd.xlane.f32.xlu0 %v42
    %v44 = vpop.xlane.xlu0 %43
    %v45 = vsel %vm33, %v41, 0.0
    %46 = vadd.xlane.f32.xlu0 %v45
    %v47 = vpop.xlane.xlu0 %46
    %v48 = vmul.f32 %v36, 0.03125
    %v49 = vmul.f32 %v39, 0.03125
    %v50 = vmul.f32 %v44, 0.03125
    %v51 = vmul.f32 %v47, 0.03125
    %v52 = vmul.f32 %v48, %v48
    %v53 = vmul.f32 %v49, %v49
    %v54 = vsub.f32 %v50, %v52
    %v55 = vsub.f32 %v51, %v53
    %v56 = vmax.f32 %v54, 0.0
    %v57 = vmax.f32 %v55, 0.0
    %v58 = vmul.f32 %v56, 1.032258
    %v59 = vmul.f32 %v57, 1.032258
    %v60 = vrsqrt.pop %v58
    %v61 = vmul.f32 %v58, %v60
    %vm62 = vcmp.eq.f32.partialorder %v58, inf
    %v63 = vsel %vm62, %v58, %v61
    %vm64 = vcmp.eq.f32.partialorder %v58, 0.0
    %v65 = vand.u32 %v58, 2147483648
    %v66 = vsel %vm64, %v65, %v63
    %v67 = vrsqrt.pop %v59
    %v68 = vmul.f32 %v59, %v67
    %vm69 = vcmp.eq.f32.partialorder %v59, inf
    %v70 = vsel %vm69, %v59, %v68
    %vm71 = vcmp.eq.f32.partialorder %v59, 0.0
    %v72 = vand.u32 %v59, 2147483648
    %v73 = vsel %vm71, %v72, %v70
    %v74 = vadd.f32 %v66, 1e-06
    %v75 = vadd.f32 %v73, 1e-06
    %v76 = vrcp.pop %v74
    %v77 = vrcp.pop %v75
    %v79 = vlaneseq
    %v80 = vshrl.u32 %v79, 7
    %v81 = vsub.s32 0, %v80
    %v82 = vrot.slane %v31, %v81
    %v84 = vmul.f32 %v82, %v76
    %v85 = vmul.f32 %v82, %v77
    %v86 = vsub.f32 %v29, %v48
    %v87 = vsub.f32 %v30, %v49
    %v88 = vmul.f32 %v86, %v84
    %v89 = vmul.f32 %v87, %v85
    %v90 = vadd.f32 %v29, %v88
    %v91 = vadd.f32 %v30, %v89
    %v93 = vlaneseq
    %v94 = vshrl.u32 %v93, 7
    %v95 = vsub.s32 0, %v94
    %v96 = vrot.slane %v32, %v95
    %v98 = vadd.f32 %v90, %v96
    %v99 = vadd.f32 %v91, %v96
    %100 = vst.msk [vmem:[#allocation5] sm:$0xff] %vm33, %v98
    %101 = vst.msk [vmem:[#allocation5 + $0x8] sm:$0xff] %vm33, %v99
    // Predicated region
    $region18: #{tpu_custom_call.1} parent=1 // pred_check
      _
    $region19: #{tpu_custom_call.1} parent=1 // pred_check_branch
      %103 = sbr.rel (0) target = $region21
    $region20: #{tpu_custom_call.1} parent=1 // pred_region
      %s105 = ssub.s32 256, 256
      %106 = vsyncadd [#allocation4], %s105
      %s107 = sshll.u32 [#allocation5], 4
      %s108 = int_to_ptr.vmem [resolvable:$true] %s107
      %113 = dma.vmem_to_hbm [thread:$0]  %s108, 256, %s3, [#allocation4], 128, 128, 8
    $region21: #{tpu_custom_call.1} parent=1 // pred_fallthru
      _
    // Predicated region
    $region22: #{tpu_custom_call.1} parent=1 // pred_check
      _
    $region23: #{tpu_custom_call.1} parent=1 // pred_check_branch
      %115 = sbr.rel (0) target = $region25
    $region24: #{tpu_custom_call.1} parent=1 // pred_region
      %116 = dma.done [#allocation4], 256
    $region25: #{tpu_custom_call.1} parent=1 // pred_fallthru
      _
    %117 = vsyncpa [#allocation3], 1
    %118 = vsyncpa [#allocation4], 1

</llo_original>
